<compile_context>
chip_gen: v5e
topology: v5e:2x2
jax: 0.10.0
libtpu: 0.0.40
codegen_flags: <defaults>
</compile_context>

<pallas_src>
import functools

import jax
import jax.numpy as jnp
from jax.experimental import pallas as pl
from jax.experimental.pallas import tpu as pltpu


def _round_up(v, m):
    return ((v + m - 1) // m) * m


# ----------------------------------------------------------------------------
# Hardware queries (trace-time, with conservative fallbacks)
# ----------------------------------------------------------------------------
def _vmem_capacity_bytes():
    try:
        cap = int(pltpu.get_tpu_info().vmem_capacity_bytes)
        if cap > 0:
            return cap
    except Exception:
        pass
    return 64 * 1024 * 1024  # conservative: v7x per-TC VMEM


def _per_degree_threshold():
    # per-degree matmuls already fill v5e's 128-deep MXU at in_pad=128;
    # v6e/v7x MXUs are 256 deep -> keep fusing the degree axis up to 256.
    try:
        kind = jax.devices()[0].device_kind.lower()
        if "v5 lite" in kind or "v5e" in kind or "v5lite" in kind:
            return 128
    except Exception:
        pass
    return 256


# ----------------------------------------------------------------------------
# Per-layer kernel
# ----------------------------------------------------------------------------
def _cheby_layer_kernel(x_ref, w_ref, b_ref, o_ref, *scratch, degree, fuse_k):
    # x_ref: (TB, in_pad) f32     w_ref: (degree*in_pad, TN) bf16
    # b_ref: (1, TN) f32          o_ref: (TB, TN) f32
    # scratch: (feats_ref,) bf16 (TB, degree*in_pad) iff fuse_k
    in_pad = x_ref.shape[1]
    wdt = w_ref.dtype
    eps = 1e-6
    t = jnp.clip(jnp.tanh(x_ref[...].astype(jnp.float32)), -1.0 + eps, 1.0 - eps)

    if fuse_k:
        # Small in_features: one big MXU contraction of depth K = degree*in_pad.
        # Each T_d is written straight into the VMEM feats slab (only two
        # polynomials live at a time; no concatenate copy).
        feats_ref = scratch[0]
        t_prev, t_cur = jnp.ones_like(t), t
        feats_ref[:, pl.ds(0, in_pad)] = t_cur.astype(wdt)
        for d in range(2, degree + 1):
            t_next = 2.0 * t * t_cur - t_prev
            feats_ref[:, pl.ds((d - 1) * in_pad, in_pad)] = t_next.astype(wdt)
            t_prev, t_cur = t_cur, t_next
        acc = jnp.dot(feats_ref[...], w_ref[...],
                      preferred_element_type=jnp.float32)
    else:
        # Large in_features: K already fills the MXU; accumulate per degree and
        # never materialize the (TB, degree*in_pad) slab.
        t_prev, t_cur = jnp.ones_like(t), t
        acc = jnp.dot(t_cur.astype(wdt), w_ref[pl.ds(0, in_pad), :],
                      preferred_element_type=jnp.float32)
        for d in range(2, degree + 1):
            t_next = 2.0 * t * t_cur - t_prev
            acc += jnp.dot(t_next.astype(wdt),
                           w_ref[pl.ds((d - 1) * in_pad, in_pad), :],
                           preferred_element_type=jnp.float32)
            t_prev, t_cur = t_cur, t_next

    # d=0 contribution (column sum of coeffs[:,:,0]) pre-folded into bias.
    o_ref[...] = (acc + b_ref[...].astype(jnp.float32)).astype(o_ref.dtype)


# ----------------------------------------------------------------------------
# Fused whole-network kernel (grid over batch tiles only)
# ----------------------------------------------------------------------------
def _cheby_fused_kernel(*refs, degree, layer_dims):
    n = len(layer_dims)
    x_ref = refs[0]
    o_ref = refs[1 + 2 * n]
    feats_ref = refs[2 + 2 * n]          # (TB, max_K) bf16 scratch, reused per layer
    eps = 1e-6

    act = x_ref[...].astype(jnp.float32)
    for l, (in_pad, K, out_pad) in enumerate(layer_dims):
        w_ref = refs[1 + 2 * l]
        b_ref = refs[2 + 2 * l]
        wdt = w_ref.dtype
        t = jnp.clip(jnp.tanh(act), -1.0 + eps, 1.0 - eps)
        t_prev, t_cur = jnp.ones_like(t), t
        feats_ref[:, pl.ds(0, in_pad)] = t_cur.astype(wdt)
        for d in range(2, degree + 1):
            t_next = 2.0 * t * t_cur - t_prev
            feats_ref[:, pl.ds((d - 1) * in_pad, in_pad)] = t_next.astype(wdt)
            t_prev, t_cur = t_cur, t_next
        acc = jnp.dot(feats_ref[:, pl.ds(0, K)], w_ref[...],
                      preferred_element_type=jnp.float32)
        act = acc + b_ref[...].astype(jnp.float32)
    o_ref[...] = act.astype(o_ref.dtype)


# ----------------------------------------------------------------------------
# VMEM budgeting / tiling
# ----------------------------------------------------------------------------
def _vmem_estimate(tb, in_pad, K, tn, w_bytes, fuse_k):
    f32 = 4
    # double-buffered pipeline blocks: x, W, bias, out
    io = 2 * (tb * in_pad * f32 + K * tn * w_bytes + tn * f32 + tb * tn * f32)
    scratch = tb * tn * f32                    # f32 accumulator
    scratch += 4 * tb * in_pad * f32           # t / t_prev / t_cur / t_next
    if fuse_k:
        scratch += tb * K * w_bytes            # feats scratch slab (bf16)
    return io + scratch + (1 << 20)            # compiler-internal allowance


def _choose_tiles(B, in_pad, K, out_pad, budget, w_bytes, fuse_k):
    tb = min(512, _round_up(max(B, 1), 8))
    n_blocks = out_pad // 128
    # prefer tn = out_pad (j axis collapses), else largest 128-mult divisor
    cands = [nb * 128 for nb in range(n_blocks, 0, -1) if n_blocks % nb == 0]
    tn = 128
    for cand in cands:
        if _vmem_estimate(tb, in_pad, K, cand, w_bytes, fuse_k) <= budget:
            tn = cand
            break
    while _vmem_estimate(tb, in_pad, K, tn, w_bytes, fuse_k) > budget and tb > 8:
        tb = _round_up(max(8, tb // 2), 8)
    return tb, tn


def _fused_plan(B, packed, degree, budget):
    """Return (tb, layer_dims, max_K) if the whole network fits VMEM, else None."""
    dims, w_total, max_K, max_pad = [], 0, 0, 0
    for (w, b) in packed:
        K, out_pad = w.shape
        in_pad = K // degree
        dims.append((in_pad, K, out_pad))
        w_total += 2 * (K * out_pad * w.dtype.itemsize + out_pad * 4)
        max_K = max(max_K, K)
        max_pad = max(max_pad, in_pad, out_pad)
    for a, b2 in zip(dims[:-1], dims[1:]):
        if a[2] != b2[0]:
            return None
    in_pad0, out_pad_last = dims[0][0], dims[-1][2]

    def est(tb):
        f32 = 4
        io = 2 * tb * (in_pad0 + out_pad_last) * f32
        scratch = tb * max_K * packed[0][0].dtype.itemsize
        temps = 6 * tb * max_pad * f32     # act, t, t_prev, t_cur, t_next, acc
        return w_total + io + scratch + temps + (2 << 20)

    tb = min(512, _round_up(max(B, 1), 8))
    while est(tb) > budget and tb > 8:
        tb = _round_up(max(8, tb // 2), 8)
    if est(tb) > budget:
        return None
    return tb, tuple(dims), max_K


# ----------------------------------------------------------------------------
# Wrappers
# ----------------------------------------------------------------------------
def cheby_kan_layer(x, w, b, *, degree, tb, tn, fuse_k, vmem_limit):
    """One ChebyKANLayer on packed params. x rows already padded to tb."""
    B = x.shape[0]
    K, out_pad = w.shape
    in_pad = K // degree
    assert K == degree * in_pad and x.shape[1] == in_pad
    assert B % tb == 0 and out_pad % tn == 0

    flops = 2 * B * K * out_pad + 4 * degree * B * in_pad
    cost = pl.CostEstimate(
        flops=flops, transcendentals=B * in_pad,
        bytes_accessed=4 * B * in_pad + w.size * w.dtype.itemsize
        + 4 * out_pad + 4 * B * out_pad)

    kernel = functools.partial(_cheby_layer_kernel, degree=degree, fuse_k=fuse_k)
    scratch_shapes = [pltpu.VMEM((tb, K), w.dtype)] if fuse_k else []

    return pl.pallas_call(
        kernel,
        out_shape=jax.ShapeDtypeStruct((B, out_pad), jnp.float32),
        grid=(out_pad // tn, B // tb),  # W block constant on the fast (batch) axis
        in_specs=[
            pl.BlockSpec((tb, in_pad), lambda j, i: (i, 0)),
            pl.BlockSpec((K, tn), lambda j, i: (0, j)),
            pl.BlockSpec((1, tn), lambda j, i: (0, j)),
        ],
        out_specs=pl.BlockSpec((tb, tn), lambda j, i: (i, j)),
        scratch_shapes=scratch_shapes,
        compiler_params=pltpu.CompilerParams(
            dimension_semantics=("parallel", "parallel"),
            vmem_limit_bytes=vmem_limit),
        cost_estimate=cost,
    )(x, w, b)


def _cheby_fused_forward(x, packed, *, degree, tb, dims, max_K, vmem_limit):
    B = x.shape[0]
    b_rows = pl.cdiv(B, tb) * tb
    if b_rows != B:
        x = jnp.pad(x, ((0, b_rows - B), (0, 0)))
    in_pad0 = dims[0][0]
    out_pad_last = dims[-1][2]

    in_specs = [pl.BlockSpec((tb, in_pad0), lambda i: (i, 0))]
    args = [x]
    flops = transc = wbytes = 0
    for (w, b), (in_pad, K, out_pad) in zip(packed, dims):
        in_specs.append(pl.BlockSpec((K, out_pad), lambda i: (0, 0)))
        in_specs.append(pl.BlockSpec((1, out_pad), lambda i: (0, 0)))
        args.extend([w, b])
        flops += 2 * b_rows * K * out_pad + 4 * degree * b_rows * in_pad
        transc += b_rows * in_pad
        wbytes += w.size * w.dtype.itemsize + b.size * 4

    kernel = functools.partial(_cheby_fused_kernel, degree=degree,
                               layer_dims=dims)
    y = pl.pallas_call(
        kernel,
        out_shape=jax.ShapeDtypeStruct((b_rows, out_pad_last), jnp.float32),
        grid=(b_rows // tb,),
        in_specs=in_specs,
        out_specs=pl.BlockSpec((tb, out_pad_last), lambda i: (i, 0)),
        scratch_shapes=[pltpu.VMEM((tb, max_K), packed[0][0].dtype)],
        compiler_params=pltpu.CompilerParams(
            dimension_semantics=("parallel",),  # batch axis shards across TCs
            vmem_limit_bytes=vmem_limit),
        cost_estimate=pl.CostEstimate(
            flops=flops, transcendentals=transc,
            bytes_accessed=4 * b_rows * (in_pad0 + out_pad_last) + wbytes),
    )(*args)
    return y[:B]


# ----------------------------------------------------------------------------
# Parameter init / packing / forward
# ----------------------------------------------------------------------------
def init_cheby_kan_params(key, layers_hidden, degree):
    """Matches nn.init.normal_(std=1/(in_features*(degree+1)))."""
    params = []
    for in_f, out_f in zip(layers_hidden[:-1], layers_hidden[1:]):
        key, sub = jax.random.split(key)
        std = 1.0 / (in_f * (degree + 1))
        params.append(std * jax.random.normal(
            sub, (in_f, out_f, degree + 1), dtype=jnp.float32))
    return params


def pack_cheby_params(params, degree, w_dtype=jnp.bfloat16):
    """One-time packing: transpose to (degree, in, out), pad in/out dims to
    lane-dense multiples of 128, fold d=0 into an f32 bias, flatten W to 2-D
    and cast to bf16 (MXU-native)."""
    packed = []
    prev_out_pad = None
    for coeffs in params:
        in_f, out_f, dp1 = coeffs.shape
        assert dp1 == degree + 1
        in_pad = _round_up(in_f, 128) if prev_out_pad is None else prev_out_pad
        assert in_pad >= in_f
        out_pad = _round_up(out_f, 128)

        bias = coeffs[:, :, 0].sum(axis=0)                       # (out_f,)
        bias = jnp.pad(bias, (0, out_pad - out_f)).reshape(1, out_pad)
        bias = jnp.asarray(bias, jnp.float32)

        if degree >= 1:
            w = jnp.transpose(coeffs[:, :, 1:], (2, 0, 1))       # (deg, in, out)
            w = jnp.pad(w, ((0, 0), (0, in_pad - in_f), (0, out_pad - out_f)))
            w = w.reshape(degree * in_pad, out_pad).astype(w_dtype)
        else:
            w = jnp.zeros((0, out_pad), w_dtype)

        packed.append((w, bias))
        prev_out_pad = out_pad
    return packed


def cheby_kan_forward(x, packed, *, degree, in_features, out_features,
                      allow_fused=True):
    """ChebyKAN forward on packed params.  Padded lanes stay exactly zero
    between layers (zero coeff rows/cols), so only the final output is sliced."""
    x = jnp.asarray(x, jnp.float32).reshape(-1, in_features)
    B = x.shape[0]

    if degree == 0:
        # every layer's output equals its d=0 bias (independent of the input)
        bias = packed[-1][1].astype(jnp.float32)
        return jnp.broadcast_to(bias, (B, bias.shape[1]))[:, :out_features]

    # pad input features once to the layer-0 packed width
    in_pad0 = packed[0][0].shape[0] // degree
    if in_features < in_pad0:
        x = jnp.pad(x, ((0, 0), (0, in_pad0 - in_features)))

    capacity = _vmem_capacity_bytes()
    budget = int(0.70 * capacity)
    vmem_limit = max(32 * 1024 * 1024, int(0.85 * capacity))

    if allow_fused:
        plan = _fused_plan(B, packed, degree, budget)
        if plan is not None:
            tb, dims, max_K = plan
            y = _cheby_fused_forward(x, packed, degree=degree, tb=tb, dims=dims,
                                     max_K=max_K, vmem_limit=vmem_limit)
            return y[:, :out_features]

    # -------- per-layer path: pad batch once, slice once at the end --------
    thresh = _per_degree_threshold()
    plans = []
    for (w, b) in packed:
        K, out_pad = w.shape
        in_pad = K // degree
        fuse_k = in_pad < thresh
        tb_l, tn_l = _choose_tiles(B, in_pad, K, out_pad, budget,
                                   w.dtype.itemsize, fuse_k)
        plans.append((fuse_k, tb_l, tn_l))
    tb = min(p[1] for p in plans)
    b_rows = pl.cdiv(B, tb) * tb
    if b_rows != B:
        x = jnp.pad(x, ((0, b_rows - B), (0, 0)))
    for (w, b), (fuse_k, _, tn) in zip(packed, plans):
        x = cheby_kan_layer(x, w, b, degree=degree, tb=tb, tn=tn,
                            fuse_k=fuse_k, vmem_limit=vmem_limit)
    return x[:B, :out_features]


# ----------------------------------------------------------------------------
# Pure-JAX reference (acos/cos form, mirrors the PyTorch code, f32 params)
# ----------------------------------------------------------------------------
def _reference_forward(x, params):
    in_f = params[0].shape[0]
    x = x.reshape(-1, in_f)
    for coeffs in params:
        degree = coeffs.shape[2] - 1
        t = jnp.clip(jnp.tanh(x), -1 + 1e-6, 1 - 1e-6)
        tt = jnp.arccos(t)[:, :, None] * jnp.arange(degree + 1, dtype=jnp.float32)
        x = jnp.einsum('bid,iod->bo', jnp.cos(tt), coeffs)
    return x


if __name__ == "__main__":
    layers_hidden = [16, 32, 8]
    degree = 3
    batch = 8

    key = jax.random.PRNGKey(0)
    key, xkey = jax.random.split(key)
    x = jax.random.normal(xkey, (batch, layers_hidden[0]), dtype=jnp.float32)

    params = init_cheby_kan_params(key, layers_hidden, degree)
    packed = pack_cheby_params(params, degree)
    y_ref = _reference_forward(x, params)

    # fused whole-network kernel (taken for this small model)
    fwd_fused = jax.jit(functools.partial(
        cheby_kan_forward, degree=degree,
        in_features=layers_hidden[0], out_features=layers_hidden[-1]))
    y = jax.block_until_ready(fwd_fused(x, packed))
    assert y.shape == (batch, layers_hidden[-1])
    # bf16 weights/features (f32 accumulation) -> looser tolerance than pure f32
    assert jnp.allclose(y, y_ref, atol=5e-3, rtol=5e-2), "fused path mismatch"

    # also exercise the per-layer tiled path
    fwd_layered = jax.jit(functools.partial(
        cheby_kan_forward, degree=degree,
        in_features=layers_hidden[0], out_features=layers_hidden[-1],
        allow_fused=False))
    y2 = jax.block_until_ready(fwd_layered(x, packed))
    assert y2.shape == (batch, layers_hidden[-1])
    assert jnp.allclose(y2, y_ref, atol=5e-3, rtol=5e-2), "layered path mismatch"

    print("KERNEL_OK")
</pallas_src>

<mosaic_0001>
module attributes {stable_mosaic.version = 11 : i64} {
  func.func @_cheby_fused_kernel(%arg0: i32, %arg1: memref<8x128xf32, #tpu.memory_space<vmem>>, %arg2: memref<384x128xbf16, #tpu.memory_space<vmem>>, %arg3: memref<1x128xf32, #tpu.memory_space<vmem>>, %arg4: memref<384x128xbf16, #tpu.memory_space<vmem>>, %arg5: memref<1x128xf32, #tpu.memory_space<vmem>>, %arg6: memref<8x128xf32, #tpu.memory_space<vmem>>, %arg7: memref<8x384xbf16, #tpu.memory_space<vmem>>) attributes {dimension_semantics = [#tpu.dimension_semantics<parallel>], iteration_bounds = array<i64: 1>, scalar_prefetch = 0 : i64, scratch_operands = 1 : i64, tpu.core_type = #tpu.core_type<tc>, window_params = [{transform_indices = @transform_0, window_bounds = array<i64: 8, 128>}, {pipeline_mode = #tpu.pipeline_mode<synchronous>, transform_indices = @transform_1, window_bounds = array<i64: 384, 128>}, {pipeline_mode = #tpu.pipeline_mode<synchronous>, transform_indices = @transform_2, window_bounds = array<i64: 1, 128>}, {pipeline_mode = #tpu.pipeline_mode<synchronous>, transform_indices = @transform_3, window_bounds = array<i64: 384, 128>}, {pipeline_mode = #tpu.pipeline_mode<synchronous>, transform_indices = @transform_4, window_bounds = array<i64: 1, 128>}, {transform_indices = @transform_5, window_bounds = array<i64: 8, 128>}]} {
    %c0 = arith.constant 0 : index
    %c0_0 = arith.constant 0 : index
    %0 = vector.load %arg1[%c0, %c0_0] : memref<8x128xf32, #tpu.memory_space<vmem>>, vector<8x128xf32>
    %1 = math.tanh %0 : vector<8x128xf32>
    %cst = arith.constant -0.999998986 : f32
    %cst_1 = arith.constant 0.999998986 : f32
    %2 = vector.broadcast %cst : f32 to vector<8x128xf32>
    %3 = arith.maximumf %2, %1 : vector<8x128xf32>
    %4 = vector.broadcast %cst_1 : f32 to vector<8x128xf32>
    %5 = arith.minimumf %4, %3 : vector<8x128xf32>
    %cst_2 = arith.constant 1.000000e+00 : f32
    %6 = vector.broadcast %cst_2 : f32 to vector<8x128xf32>
    %7 = arith.truncf %5 : vector<8x128xf32> to vector<8x128xbf16>
    %c0_3 = arith.constant 0 : index
    %c0_4 = arith.constant 0 : index
    %8 = vector.load %arg7[%c0_3, %c0_4] : memref<8x384xbf16, #tpu.memory_space<vmem>>, vector<8x128xbf16>
    tpu.vector_store %arg7[%c0_3, %c0_4], %7 {strides = array<i32>} : memref<8x384xbf16, #tpu.memory_space<vmem>>, vector<8x128xbf16>,
    %cst_5 = arith.constant 2.000000e+00 : f32
    %9 = vector.broadcast %cst_5 : f32 to vector<8x128xf32>
    %10 = arith.mulf %9, %5 : vector<8x128xf32>
    %11 = arith.mulf %10, %5 : vector<8x128xf32>
    %12 = arith.subf %11, %6 : vector<8x128xf32>
    %13 = arith.truncf %12 : vector<8x128xf32> to vector<8x128xbf16>
    %c0_6 = arith.constant 0 : index
    %c128 = arith.constant 128 : index
    %14 = vector.load %arg7[%c0_6, %c128] : memref<8x384xbf16, #tpu.memory_space<vmem>>, vector<8x128xbf16>
    tpu.vector_store %arg7[%c0_6, %c128], %13 {strides = array<i32>} : memref<8x384xbf16, #tpu.memory_space<vmem>>, vector<8x128xbf16>,
    %cst_7 = arith.constant 2.000000e+00 : f32
    %15 = vector.broadcast %cst_7 : f32 to vector<8x128xf32>
    %16 = arith.mulf %15, %5 : vector<8x128xf32>
    %17 = arith.mulf %16, %12 : vector<8x128xf32>
    %18 = arith.subf %17, %5 : vector<8x128xf32>
    %19 = arith.truncf %18 : vector<8x128xf32> to vector<8x128xbf16>
    %c0_8 = arith.constant 0 : index
    %c256 = arith.constant 256 : index
    %20 = vector.load %arg7[%c0_8, %c256] : memref<8x384xbf16, #tpu.memory_space<vmem>>, vector<8x128xbf16>
    tpu.vector_store %arg7[%c0_8, %c256], %19 {strides = array<i32>} : memref<8x384xbf16, #tpu.memory_space<vmem>>, vector<8x128xbf16>,
    %c0_9 = arith.constant 0 : index
    %c0_10 = arith.constant 0 : index
    %21 = vector.load %arg7[%c0_9, %c0_10] : memref<8x384xbf16, #tpu.memory_space<vmem>>, vector<8x384xbf16>
    %c0_11 = arith.constant 0 : index
    %c0_12 = arith.constant 0 : index
    %22 = vector.load %arg2[%c0_11, %c0_12] : memref<384x128xbf16, #tpu.memory_space<vmem>>, vector<384x128xbf16>
    %cst_13 = arith.constant dense<0.000000e+00> : vector<8x128xf32>
    %23 = tpu.matmul %21, %22, %cst_13 {dimension_numbers = #tpu.dot_dimension_numbers<[1], [0], [0], [1], [0, 0, 1, 1], [], []>} : vector<8x384xbf16>, vector<384x128xbf16>, vector<8x128xf32> -> vector<8x128xf32>
    %c0_14 = arith.constant 0 : index
    %c0_15 = arith.constant 0 : index
    %24 = vector.load %arg3[%c0_14, %c0_15] : memref<1x128xf32, #tpu.memory_space<vmem>>, vector<1x128xf32>
    %25 = vector.broadcast %24 : vector<1x128xf32> to vector<8x128xf32>
    %26 = arith.addf %23, %25 : vector<8x128xf32>
    %27 = math.tanh %26 : vector<8x128xf32>
    %cst_16 = arith.constant -0.999998986 : f32
    %cst_17 = arith.constant 0.999998986 : f32
    %28 = vector.broadcast %cst_16 : f32 to vector<8x128xf32>
    %29 = arith.maximumf %28, %27 : vector<8x128xf32>
    %30 = vector.broadcast %cst_17 : f32 to vector<8x128xf32>
    %31 = arith.minimumf %30, %29 : vector<8x128xf32>
    %cst_18 = arith.constant 1.000000e+00 : f32
    %32 = vector.broadcast %cst_18 : f32 to vector<8x128xf32>
    %33 = arith.truncf %31 : vector<8x128xf32> to vector<8x128xbf16>
    %c0_19 = arith.constant 0 : index
    %c0_20 = arith.constant 0 : index
    %34 = vector.load %arg7[%c0_19, %c0_20] : memref<8x384xbf16, #tpu.memory_space<vmem>>, vector<8x128xbf16>
    tpu.vector_store %arg7[%c0_19, %c0_20], %33 {strides = array<i32>} : memref<8x384xbf16, #tpu.memory_space<vmem>>, vector<8x128xbf16>,
    %cst_21 = arith.constant 2.000000e+00 : f32
    %35 = vector.broadcast %cst_21 : f32 to vector<8x128xf32>
    %36 = arith.mulf %35, %31 : vector<8x128xf32>
    %37 = arith.mulf %36, %31 : vector<8x128xf32>
    %38 = arith.subf %37, %32 : vector<8x128xf32>
    %39 = arith.truncf %38 : vector<8x128xf32> to vector<8x128xbf16>
    %c0_22 = arith.constant 0 : index
    %c128_23 = arith.constant 128 : index
    %40 = vector.load %arg7[%c0_22, %c128_23] : memref<8x384xbf16, #tpu.memory_space<vmem>>, vector<8x128xbf16>
    tpu.vector_store %arg7[%c0_22, %c128_23], %39 {strides = array<i32>} : memref<8x384xbf16, #tpu.memory_space<vmem>>, vector<8x128xbf16>,
    %cst_24 = arith.constant 2.000000e+00 : f32
    %41 = vector.broadcast %cst_24 : f32 to vector<8x128xf32>
    %42 = arith.mulf %41, %31 : vector<8x128xf32>
    %43 = arith.mulf %42, %38 : vector<8x128xf32>
    %44 = arith.subf %43, %31 : vector<8x128xf32>
    %45 = arith.truncf %44 : vector<8x128xf32> to vector<8x128xbf16>
    %c0_25 = arith.constant 0 : index
    %c256_26 = arith.constant 256 : index
    %46 = vector.load %arg7[%c0_25, %c256_26] : memref<8x384xbf16, #tpu.memory_space<vmem>>, vector<8x128xbf16>
    tpu.vector_store %arg7[%c0_25, %c256_26], %45 {strides = array<i32>} : memref<8x384xbf16, #tpu.memory_space<vmem>>, vector<8x128xbf16>,
    %c0_27 = arith.constant 0 : index
    %c0_28 = arith.constant 0 : index
    %47 = vector.load %arg7[%c0_27, %c0_28] : memref<8x384xbf16, #tpu.memory_space<vmem>>, vector<8x384xbf16>
    %c0_29 = arith.constant 0 : index
    %c0_30 = arith.constant 0 : index
    %48 = vector.load %arg4[%c0_29, %c0_30] : memref<384x128xbf16, #tpu.memory_space<vmem>>, vector<384x128xbf16>
    %cst_31 = arith.constant dense<0.000000e+00> : vector<8x128xf32>
    %49 = tpu.matmul %47, %48, %cst_31 {dimension_numbers = #tpu.dot_dimension_numbers<[1], [0], [0], [1], [0, 0, 1, 1], [], []>} : vector<8x384xbf16>, vector<384x128xbf16>, vector<8x128xf32> -> vector<8x128xf32>
    %c0_32 = arith.constant 0 : index
    %c0_33 = arith.constant 0 : index
    %50 = vector.load %arg5[%c0_32, %c0_33] : memref<1x128xf32, #tpu.memory_space<vmem>>, vector<1x128xf32>
    %51 = vector.broadcast %50 : vector<1x128xf32> to vector<8x128xf32>
    %52 = arith.addf %49, %51 : vector<8x128xf32>
    %c0_34 = arith.constant 0 : index
    %c0_35 = arith.constant 0 : index
    %53 = vector.load %arg6[%c0_34, %c0_35] : memref<8x128xf32, #tpu.memory_space<vmem>>, vector<8x128xf32>
    tpu.vector_store %arg6[%c0_34, %c0_35], %52 {strides = array<i32>} : memref<8x128xf32, #tpu.memory_space<vmem>>, vector<8x128xf32>,
    return
  }
  func.func @transform_0(%arg0: i32) -> (i32, i32) {
    %c0_i32 = arith.constant 0 : i32
    %c0_i32_0 = arith.constant 0 : i32
    return %arg0, %c0_i32 : i32, i32
  }
  func.func @transform_1(%arg0: i32) -> (i32, i32) {
    %c0_i32 = arith.constant 0 : i32
    %c0_i32_0 = arith.constant 0 : i32
    %c0_i32_1 = arith.constant 0 : i32
    return %c0_i32, %c0_i32_0 : i32, i32
  }
  func.func @transform_2(%arg0: i32) -> (i32, i32) {
    %c0_i32 = arith.constant 0 : i32
    %c0_i32_0 = arith.constant 0 : i32
    %c0_i32_1 = arith.constant 0 : i32
    return %c0_i32, %c0_i32_0 : i32, i32
  }
  func.func @transform_3(%arg0: i32) -> (i32, i32) {
    %c0_i32 = arith.constant 0 : i32
    %c0_i32_0 = arith.constant 0 : i32
    %c0_i32_1 = arith.constant 0 : i32
    return %c0_i32, %c0_i32_0 : i32, i32
  }
  func.func @transform_4(%arg0: i32) -> (i32, i32) {
    %c0_i32 = arith.constant 0 : i32
    %c0_i32_0 = arith.constant 0 : i32
    %c0_i32_1 = arith.constant 0 : i32
    return %c0_i32, %c0_i32_0 : i32, i32
  }
  func.func @transform_5(%arg0: i32) -> (i32, i32) {
    %c0_i32 = arith.constant 0 : i32
    %c0_i32_0 = arith.constant 0 : i32
    return %arg0, %c0_i32 : i32, i32
  }
}

</mosaic_0001>

<llo_original>
// kernel: cheby_kan_forward.1
$region0: #{cheby_kan_forward.1}
  #allocation0 [shape = 'u32[]', space=smem, size = 0x4, offset = 0x4, fixed_abs, tag = 'smem constant byte address 0x4 - core index']
  #allocation1 [shape = 'u32[72,128]{1,0:T(1,128)}', space=vmem, size = 0x9000, scoped, tag = 'internal scratch']
  #allocation2 [shape = 'bf16[8,384]{1,0:T(8,128)(2,1)}', space=vmem, size = 0x1800, scoped, tag = 'scratch operand']
  %s0 = inlined_call_operand.vmem [shape: f32[8,128], index: 0, kind: input, shape index: {}]
  %s1 = inlined_call_operand.hbm [shape: bf16[384,128], index: 1, kind: input, shape index: {}]
  %s2 = inlined_call_operand.vmem [shape: f32[1,128], index: 2, kind: input, shape index: {}]
  %s3 = inlined_call_operand.hbm [shape: bf16[384,128], index: 3, kind: input, shape index: {}]
  %s4 = inlined_call_operand.vmem [shape: f32[1,128], index: 4, kind: input, shape index: {}]
  %s5 = inlined_call_operand.hbm [shape: f32[8,128], index: 5, kind: output, shape index: {}]
  %s6 = sld [smem:[#allocation0]]
  $region38: #{cheby_kan_forward.1} parent=0
    _
  %s8 = ssub.s32 1, %s6
  %s9 = scalar_select 0, %s8, %s6
  $region1: #{cheby_kan_forward.1} parent=0
    #allocation3 [shape = 'u8[98304]{0}', space=vmem, size = 0x18000, scoped, tag = 'input window, operand 1, single buffered']
    #allocation4 [shape = 's32[1]{0}', space=sflag, size = 0x4, scoped, tag = 'scoped memory for cheby_kan_forward.1']
    #allocation5 [shape = 's32[1]{0}', space=sflag, size = 0x4, scoped, tag = 'scoped memory for cheby_kan_forward.1']
    #allocation6 [shape = 'u8[98304]{0}', space=vmem, size = 0x18000, scoped, tag = 'input window, operand 3, single buffered']
    #allocation7 [shape = 's32[1]{0}', space=sflag, size = 0x4, scoped, tag = 'scoped memory for cheby_kan_forward.1']
    #allocation8 [shape = 'u8[4096]{0}', space=vmem, size = 0x1000, scoped, tag = 'output window, operand 0, single buffered']
    %10 = vsyncpa [#allocation4], 0
    %11 = vsyncpa [#allocation7], 0
    %12 = vsyncpa [#allocation5], 0
    // Predicated region
    $region2: #{cheby_kan_forward.1} parent=1 // pred_check
      _
    $region3: #{cheby_kan_forward.1} parent=1 // pred_check_branch
      %14 = sbr.rel (0) target = $region5
    $region4: #{cheby_kan_forward.1} parent=1 // pred_region
      _
    $region5: #{cheby_kan_forward.1} parent=1 // pred_fallthru
      _
    // Predicated region
    $region6: #{cheby_kan_forward.1} parent=1 // pred_check
      _
    $region7: #{cheby_kan_forward.1} parent=1 // pred_check_branch
      %16 = sbr.rel (0) target = $region9
    $region8: #{cheby_kan_forward.1} parent=1 // pred_region
      %18 = vsyncadd [#allocation4], 0
      %s19 = sshll.u32 %s1, 4
      %s20 = int_to_ptr.hbm [resolvable:$true] %s19
      %s21 = sshll.u32 [#allocation3], 4
      %s22 = int_to_ptr.vmem [resolvable:$true] %s21
      %27 = dma.hbm_to_vmem [thread:$0]  %s20, 3072, %s22, [#allocation4], 64, 64, 4
    $region9: #{cheby_kan_forward.1} parent=1 // pred_fallthru
      _
    // Predicated region
    $region10: #{cheby_kan_forward.1} parent=1 // pred_check
      _
    $region11: #{cheby_kan_forward.1} parent=1 // pred_check_branch
      %29 = sbr.rel (0) target = $region13
    $region12: #{cheby_kan_forward.1} parent=1 // pred_region
      _
    $region13: #{cheby_kan_forward.1} parent=1 // pred_fallthru
      _
    // Predicated region
    $region14: #{cheby_kan_forward.1} parent=1 // pred_check
      _
    $region15: #{cheby_kan_forward.1} parent=1 // pred_check_branch
      %31 = sbr.rel (0) target = $region17
    $region16: #{cheby_kan_forward.1} parent=1 // pred_region
      %33 = vsyncadd [#allocation7], 0
      %s34 = sshll.u32 %s3, 4
      %s35 = int_to_ptr.hbm [resolvable:$true] %s34
      %s36 = sshll.u32 [#allocation6], 4
      %s37 = int_to_ptr.vmem [resolvable:$true] %s36
      %42 = dma.hbm_to_vmem [thread:$0]  %s35, 3072, %s37, [#allocation7], 64, 64, 4
    $region17: #{cheby_kan_forward.1} parent=1 // pred_fallthru
      _
    // Predicated region
    $region18: #{cheby_kan_forward.1} parent=1 // pred_check
      _
    $region19: #{cheby_kan_forward.1} parent=1 // pred_check_branch
      %44 = sbr.rel (0) target = $region21
    $region20: #{cheby_kan_forward.1} parent=1 // pred_region
      _
    $region21: #{cheby_kan_forward.1} parent=1 // pred_fallthru
      _
    // Predicated region
    $region22: #{cheby_kan_forward.1} parent=1 // pred_check
      _
    $region23: #{cheby_kan_forward.1} parent=1 // pred_check_branch
      %46 = sbr.rel (0) target = $region25
    $region24: #{cheby_kan_forward.1} parent=1 // pred_region
      %48 = dma.done [#allocation4], 3072
    $region25: #{cheby_kan_forward.1} parent=1 // pred_fallthru
      _
    // Predicated region
    $region26: #{cheby_kan_forward.1} parent=1 // pred_check
      _
    $region27: #{cheby_kan_forward.1} parent=1 // pred_check_branch
      %50 = sbr.rel (0) target = $region29
    $region28: #{cheby_kan_forward.1} parent=1 // pred_region
      %52 = dma.done [#allocation7], 3072
    $region29: #{cheby_kan_forward.1} parent=1 // pred_fallthru
      _
    %v53 = vld [vmem:[%s0] sm:$0xff]
    %v54 = vtanh.pop %v53
    %v55 = vmax.f32 %v54, -0.999999
    %v56 = vmin.f32 %v55, 0.999999
    %v57 = vpack.c.bf16 %v56, %v56
    %58 = vst [vmem:[#allocation2] sm:$0xf] %v57
    %v59 = vmul.f32 %v56, 2.0
    %v60 = vmul.f32 %v59, %v56
    %v61 = vsub.f32 %v60, 1.0
    %v62 = vpack.c.bf16 %v61, %v61
    %63 = vst [vmem:[#allocation2 + $0x4] sm:$0xf] %v62
    %v64 = vmul.f32 %v59, %v61
    %v65 = vsub.f32 %v64, %v56
    %v66 = vpack.c.bf16 %v65, %v65
    %67 = vst [vmem:[#allocation2 + $0x8] sm:$0xf] %v66
    %v68 = vld [vmem:[#allocation2] sm:$0xff]
    %v69 = vld [vmem:[#allocation2 + $0x8] sm:$0xf]
    %v70 = vld [vmem:[#allocation3] sm:$0xf]
    %v71 = vld [vmem:[#allocation3 + $0x4] sm:$0xf]
    %v72 = vld [vmem:[#allocation3 + $0x8] sm:$0xf]
    %v73 = vld [vmem:[#allocation3 + $0xc] sm:$0xf]
    %v74 = vld [vmem:[#allocation3 + $0x10] sm:$0xf]
    %v75 = vld [vmem:[#allocation3 + $0x14] sm:$0xf]
    %v76 = vld [vmem:[#allocation3 + $0x18] sm:$0xf]
    %v77 = vld [vmem:[#allocation3 + $0x1c] sm:$0xf]
    %v78 = vld [vmem:[#allocation3 + $0x20] sm:$0xf]
    %v79 = vld [vmem:[#allocation3 + $0x24] sm:$0xf]
    %v80 = vld [vmem:[#allocation3 + $0x28] sm:$0xf]
    %v81 = vld [vmem:[#allocation3 + $0x2c] sm:$0xf]
    %v82 = vld [vmem:[#allocation3 + $0x30] sm:$0xf]
    %v83 = vld [vmem:[#allocation3 + $0x34] sm:$0xf]
    %v84 = vld [vmem:[#allocation3 + $0x38] sm:$0xf]
    %v85 = vld [vmem:[#allocation3 + $0x3c] sm:$0xf]
    %v86 = vld [vmem:[#allocation3 + $0x40] sm:$0xf]
    %v87 = vld [vmem:[#allocation3 + $0x44] sm:$0xf]
    %v88 = vld [vmem:[#allocation3 + $0x48] sm:$0xf]
    %v89 = vld [vmem:[#allocation3 + $0x4c] sm:$0xf]
    %v90 = vld [vmem:[#allocation3 + $0x50] sm:$0xf]
    %v91 = vld [vmem:[#allocation3 + $0x54] sm:$0xf]
    %v92 = vld [vmem:[#allocation3 + $0x58] sm:$0xf]
    %v93 = vld [vmem:[#allocation3 + $0x5c] sm:$0xf]
    %v94 = vld [vmem:[#allocation3 + $0x60] sm:$0xf]
    %v95 = vld [vmem:[#allocation3 + $0x64] sm:$0xf]
    %v96 = vld [vmem:[#allocation3 + $0x68] sm:$0xf]
    %v97 = vld [vmem:[#allocation3 + $0x6c] sm:$0xf]
    %v98 = vld [vmem:[#allocation3 + $0x70] sm:$0xf]
    %v99 = vld [vmem:[#allocation3 + $0x74] sm:$0xf]
    %v100 = vld [vmem:[#allocation3 + $0x78] sm:$0xf]
    %v101 = vld [vmem:[#allocation3 + $0x7c] sm:$0xf]
    %v102 = vld [vmem:[#allocation3 + $0x80] sm:$0xf]
    %v103 = vld [vmem:[#allocation3 + $0x84] sm:$0xf]
    %v104 = vld [vmem:[#allocation3 + $0x88] sm:$0xf]
    %v105 = vld [vmem:[#allocation3 + $0x8c] sm:$0xf]
    %v106 = vld [vmem:[#allocation3 + $0x90] sm:$0xf]
    %v107 = vld [vmem:[#allocation3 + $0x94] sm:$0xf]
    %v108 = vld [vmem:[#allocation3 + $0x98] sm:$0xf]
    %v109 = vld [vmem:[#allocation3 + $0x9c] sm:$0xf]
    %v110 = vld [vmem:[#allocation3 + $0xa0] sm:$0xf]
    %v111 = vld [vmem:[#allocation3 + $0xa4] sm:$0xf]
    %v112 = vld [vmem:[#allocation3 + $0xa8] sm:$0xf]
    %v113 = vld [vmem:[#allocation3 + $0xac] sm:$0xf]
    %v114 = vld [vmem:[#allocation3 + $0xb0] sm:$0xf]
    %v115 = vld [vmem:[#allocation3 + $0xb4] sm:$0xf]
    %v116 = vld [vmem:[#allocation3 + $0xb8] sm:$0xf]
    %v117 = vld [vmem:[#allocation3 + $0xbc] sm:$0xf]
    %v118 = vld [vmem:[%s2] sm:$0x1]
    %v120 = vperm.slane %v118, 0
    %v124 = vunpack.c.l.b16 %v68
    %v125 = vunpack.c.h.b16 %v68
    %v126 = vunpack.c.l.b16 %v69
    %v127 = vpack.c.b16 %v124, %v124
    %v128 = vpack.c.b16 %v125, %v125
    %v129 = vpack.c.b16 %v126, %v126
    %v181 = vunpack.c.l.b16 %v70
    %v182 = vunpack.c.l.b16 %v71
    %v183 = vunpack.c.l.b16 %v72
    %v184 = vunpack.c.l.b16 %v73
    %v185 = vunpack.c.l.b16 %v74
    %v186 = vunpack.c.l.b16 %v75
    %v187 = vunpack.c.l.b16 %v76
    %v188 = vunpack.c.l.b16 %v77
    %v189 = vunpack.c.l.b16 %v78
    %v190 = vunpack.c.l.b16 %v79
    %v191 = vunpack.c.l.b16 %v80
    %v192 = vunpack.c.l.b16 %v81
    %v193 = vunpack.c.l.b16 %v82
    %v194 = vunpack.c.l.b16 %v83
    %v195 = vunpack.c.l.b16 %v84
    %v196 = vunpack.c.l.b16 %v85
    %v197 = vunpack.c.l.b16 %v86
    %v198 = vunpack.c.l.b16 %v87
    %v199 = vunpack.c.l.b16 %v88
    %v200 = vunpack.c.l.b16 %v89
    %v201 = vunpack.c.l.b16 %v90
    %v202 = vunpack.c.l.b16 %v91
    %v203 = vunpack.c.l.b16 %v92
    %v204 = vunpack.c.l.b16 %v93
    %v205 = vunpack.c.l.b16 %v94
    %v206 = vunpack.c.l.b16 %v95
    %v207 = vunpack.c.l.b16 %v96
    %v208 = vunpack.c.l.b16 %v97
    %v209 = vunpack.c.l.b16 %v98
    %v210 = vunpack.c.l.b16 %v99
    %v211 = vunpack.c.l.b16 %v100
    %v212 = vunpack.c.l.b16 %v101
    %v213 = vunpack.c.l.b16 %v102
    %v214 = vunpack.c.l.b16 %v103
    %v215 = vunpack.c.l.b16 %v104
    %v216 = vunpack.c.l.b16 %v105
    %v217 = vunpack.c.l.b16 %v106
    %v218 = vunpack.c.l.b16 %v107
    %v219 = vunpack.c.l.b16 %v108
    %v220 = vunpack.c.l.b16 %v109
    %v221 = vunpack.c.l.b16 %v110
    %v222 = vunpack.c.l.b16 %v111
    %v223 = vunpack.c.l.b16 %v112
    %v224 = vunpack.c.l.b16 %v113
    %v225 = vunpack.c.l.b16 %v114
    %v226 = vunpack.c.l.b16 %v115
    %v227 = vunpack.c.l.b16 %v116
    %v228 = vunpack.c.l.b16 %v117
    %v229 = vpack.c.b16 %v182, %v181
    %v230 = vpack.c.b16 %v184, %v183
    %v231 = vpack.c.b16 %v186, %v185
    %v232 = vpack.c.b16 %v188, %v187
    %v233 = vpack.c.b16 %v190, %v189
    %v234 = vpack.c.b16 %v192, %v191
    %v235 = vpack.c.b16 %v194, %v193
    %v236 = vpack.c.b16 %v196, %v195
    %v237 = vpack.c.b16 %v198, %v197
    %v238 = vpack.c.b16 %v200, %v199
    %v239 = vpack.c.b16 %v202, %v201
    %v240 = vpack.c.b16 %v204, %v203
    %v241 = vpack.c.b16 %v206, %v205
    %v242 = vpack.c.b16 %v208, %v207
    %v243 = vpack.c.b16 %v210, %v209
    %v244 = vpack.c.b16 %v212, %v211
    %v245 = vpack.c.b16 %v214, %v213
    %v246 = vpack.c.b16 %v216, %v215
    %v247 = vpack.c.b16 %v218, %v217
    %v248 = vpack.c.b16 %v220, %v219
    %v249 = vpack.c.b16 %v222, %v221
    %v250 = vpack.c.b16 %v224, %v223
    %v251 = vpack.c.b16 %v226, %v225
    %v252 = vpack.c.b16 %v228, %v227
    %277 = vmatpush.bf16.msra.mxu0 %v236
    %278 = vmatpush.bf16.msra.mxu0 %v235
    %279 = vmatpush.bf16.msra.mxu0 %v234
    %280 = vmatpush.bf16.msra.mxu0 %v233
    %281 = vmatpush.bf16.msra.mxu0 %v232
    %282 = vmatpush.bf16.msra.mxu0 %v231
    %283 = vmatpush.bf16.msra.mxu0 %v230
    %284 = vmatpush.bf16.msra.mxu0 %v229
    %285 = vmatmul.bf16.gmra.mxu0 %v127
    %v286 = vpop.f32.mrf.mxu0
    %v287 = vadd.f32 %v120, %v286
    %v288 = vpop.f32.mrf.mxu0
    %289 = vdwg.mxu0
    %290 = vmatpush.bf16.msra.mxu0 %v244
    %291 = vmatpush.bf16.msra.mxu0 %v243
    %292 = vmatpush.bf16.msra.mxu0 %v242
    %293 = vmatpush.bf16.msra.mxu0 %v241
    %294 = vmatpush.bf16.msra.mxu0 %v240
    %295 = vmatpush.bf16.msra.mxu0 %v239
    %296 = vmatpush.bf16.msra.mxu0 %v238
    %297 = vmatpush.bf16.msra.mxu0 %v237
    %298 = vmatmul.bf16.gmra.mxu0 %v128
    %v299 = vpop.f32.mrf.mxu0
    %v300 = vadd.f32 %v287, %v299
    %v301 = vpop.f32.mrf.mxu0
    %302 = vdwg.mxu0
    %303 = vmatpush.bf16.msra.mxu0 %v252
    %304 = vmatpush.bf16.msra.mxu0 %v251
    %305 = vmatpush.bf16.msra.mxu0 %v250
    %306 = vmatpush.bf16.msra.mxu0 %v249
    %307 = vmatpush.bf16.msra.mxu0 %v248
    %308 = vmatpush.bf16.msra.mxu0 %v247
    %309 = vmatpush.bf16.msra.mxu0 %v246
    %310 = vmatpush.bf16.msra.mxu0 %v245
    %311 = vmatmul.bf16.gmra.mxu0 %v129
    %v312 = vpop.f32.mrf.mxu0
    %v313 = vadd.f32 %v300, %v312
    %v314 = vpop.f32.mrf.mxu0
    %315 = vdwg.mxu0
    %v316 = vtanh.pop %v313
    %v317 = vmax.f32 %v316, -0.999999
    %v318 = vmin.f32 %v317, 0.999999
    %v319 = vpack.c.bf16 %v318, %v318
    %320 = vst [vmem:[#allocation2] sm:$0xf] %v319
    %v321 = vmul.f32 %v318, 2.0
    %v322 = vmul.f32 %v321, %v318
    %v323 = vsub.f32 %v322, 1.0
    %v324 = vpack.c.bf16 %v323, %v323
    %325 = vst [vmem:[#allocation2 + $0x4] sm:$0xf] %v324
    %v326 = vmul.f32 %v321, %v323
    %v327 = vsub.f32 %v326, %v318
    %v328 = vpack.c.bf16 %v327, %v327
    %329 = vst [vmem:[#allocation2 + $0x8] sm:$0xf] %v328
    %v330 = vld [vmem:[#allocation2] sm:$0xff]
    %v331 = vld [vmem:[#allocation2 + $0x8] sm:$0xf]
    %v332 = vld [vmem:[#allocation6] sm:$0xf]
    %v333 = vld [vmem:[#allocation6 + $0x4] sm:$0xf]
    %v334 = vld [vmem:[#allocation6 + $0x8] sm:$0xf]
    %v335 = vld [vmem:[#allocation6 + $0xc] sm:$0xf]
    %v336 = vld [vmem:[#allocation6 + $0x10] sm:$0xf]
    %v337 = vld [vmem:[#allocation6 + $0x14] sm:$0xf]
    %v338 = vld [vmem:[#allocation6 + $0x18] sm:$0xf]
    %v339 = vld [vmem:[#allocation6 + $0x1c] sm:$0xf]
    %v340 = vld [vmem:[#allocation6 + $0x20] sm:$0xf]
    %v341 = vld [vmem:[#allocation6 + $0x24] sm:$0xf]
    %v342 = vld [vmem:[#allocation6 + $0x28] sm:$0xf]
    %v343 = vld [vmem:[#allocation6 + $0x2c] sm:$0xf]
    %v344 = vld [vmem:[#allocation6 + $0x30] sm:$0xf]
    %v345 = vld [vmem:[#allocation6 + $0x34] sm:$0xf]
    %v346 = vld [vmem:[#allocation6 + $0x38] sm:$0xf]
    %v347 = vld [vmem:[#allocation6 + $0x3c] sm:$0xf]
    %v348 = vld [vmem:[#allocation6 + $0x40] sm:$0xf]
    %v349 = vld [vmem:[#allocation6 + $0x44] sm:$0xf]
    %v350 = vld [vmem:[#allocation6 + $0x48] sm:$0xf]
    %v351 = vld [vmem:[#allocation6 + $0x4c] sm:$0xf]
    %v352 = vld [vmem:[#allocation6 + $0x50] sm:$0xf]
    %v353 = vld [vmem:[#allocation6 + $0x54] sm:$0xf]
    %v354 = vld [vmem:[#allocation6 + $0x58] sm:$0xf]
    %v355 = vld [vmem:[#allocation6 + $0x5c] sm:$0xf]
    %v356 = vld [vmem:[#allocation6 + $0x60] sm:$0xf]
    %v357 = vld [vmem:[#allocation6 + $0x64] sm:$0xf]
    %v358 = vld [vmem:[#allocation6 + $0x68] sm:$0xf]
    %v359 = vld [vmem:[#allocation6 + $0x6c] sm:$0xf]
    %v360 = vld [vmem:[#allocation6 + $0x70] sm:$0xf]
    %v361 = vld [vmem:[#allocation6 + $0x74] sm:$0xf]
    %v362 = vld [vmem:[#allocation6 + $0x78] sm:$0xf]
    %v363 = vld [vmem:[#allocation6 + $0x7c] sm:$0xf]
    %v364 = vld [vmem:[#allocation6 + $0x80] sm:$0xf]
    %v365 = vld [vmem:[#allocation6 + $0x84] sm:$0xf]
    %v366 = vld [vmem:[#allocation6 + $0x88] sm:$0xf]
    %v367 = vld [vmem:[#allocation6 + $0x8c] sm:$0xf]
    %v368 = vld [vmem:[#allocation6 + $0x90] sm:$0xf]
    %v369 = vld [vmem:[#allocation6 + $0x94] sm:$0xf]
    %v370 = vld [vmem:[#allocation6 + $0x98] sm:$0xf]
    %v371 = vld [vmem:[#allocation6 + $0x9c] sm:$0xf]
    %v372 = vld [vmem:[#allocation6 + $0xa0] sm:$0xf]
    %v373 = vld [vmem:[#allocation6 + $0xa4] sm:$0xf]
    %v374 = vld [vmem:[#allocation6 + $0xa8] sm:$0xf]
    %v375 = vld [vmem:[#allocation6 + $0xac] sm:$0xf]
    %v376 = vld [vmem:[#allocation6 + $0xb0] sm:$0xf]
    %v377 = vld [vmem:[#allocation6 + $0xb4] sm:$0xf]
    %v378 = vld [vmem:[#allocation6 + $0xb8] sm:$0xf]
    %v379 = vld [vmem:[#allocation6 + $0xbc] sm:$0xf]
    %v380 = vld [vmem:[%s4] sm:$0x1]
    %v382 = vperm.slane %v380, 0
    %v386 = vunpack.c.l.b16 %v330
    %v387 = vunpack.c.h.b16 %v330
    %v388 = vunpack.c.l.b16 %v331
    %v389 = vpack.c.b16 %v386, %v386
    %v390 = vpack.c.b16 %v387, %v387
    %v391 = vpack.c.b16 %v388, %v388
    %v443 = vunpack.c.l.b16 %v332
    %v444 = vunpack.c.l.b16 %v333
    %v445 = vunpack.c.l.b16 %v334
    %v446 = vunpack.c.l.b16 %v335
    %v447 = vunpack.c.l.b16 %v336
    %v448 = vunpack.c.l.b16 %v337
    %v449 = vunpack.c.l.b16 %v338
    %v450 = vunpack.c.l.b16 %v339
    %v451 = vunpack.c.l.b16 %v340
    %v452 = vunpack.c.l.b16 %v341
    %v453 = vunpack.c.l.b16 %v342
    %v454 = vunpack.c.l.b16 %v343
    %v455 = vunpack.c.l.b16 %v344
    %v456 = vunpack.c.l.b16 %v345
    %v457 = vunpack.c.l.b16 %v346
    %v458 = vunpack.c.l.b16 %v347
    %v459 = vunpack.c.l.b16 %v348
    %v460 = vunpack.c.l.b16 %v349
    %v461 = vunpack.c.l.b16 %v350
    %v462 = vunpack.c.l.b16 %v351
    %v463 = vunpack.c.l.b16 %v352
    %v464 = vunpack.c.l.b16 %v353
    %v465 = vunpack.c.l.b16 %v354
    %v466 = vunpack.c.l.b16 %v355
    %v467 = vunpack.c.l.b16 %v356
    %v468 = vunpack.c.l.b16 %v357
    %v469 = vunpack.c.l.b16 %v358
    %v470 = vunpack.c.l.b16 %v359
    %v471 = vunpack.c.l.b16 %v360
    %v472 = vunpack.c.l.b16 %v361
    %v473 = vunpack.c.l.b16 %v362
    %v474 = vunpack.c.l.b16 %v363
    %v475 = vunpack.c.l.b16 %v364
    %v476 = vunpack.c.l.b16 %v365
    %v477 = vunpack.c.l.b16 %v366
    %v478 = vunpack.c.l.b16 %v367
    %v479 = vunpack.c.l.b16 %v368
    %v480 = vunpack.c.l.b16 %v369
    %v481 = vunpack.c.l.b16 %v370
    %v482 = vunpack.c.l.b16 %v371
    %v483 = vunpack.c.l.b16 %v372
    %v484 = vunpack.c.l.b16 %v373
    %v485 = vunpack.c.l.b16 %v374
    %v486 = vunpack.c.l.b16 %v375
    %v487 = vunpack.c.l.b16 %v376
    %v488 = vunpack.c.l.b16 %v377
    %v489 = vunpack.c.l.b16 %v378
    %v490 = vunpack.c.l.b16 %v379
    %v491 = vpack.c.b16 %v444, %v443
    %v492 = vpack.c.b16 %v446, %v445
    %v493 = vpack.c.b16 %v448, %v447
    %v494 = vpack.c.b16 %v450, %v449
    %v495 = vpack.c.b16 %v452, %v451
    %v496 = vpack.c.b16 %v454, %v453
    %v497 = vpack.c.b16 %v456, %v455
    %v498 = vpack.c.b16 %v458, %v457
    %v499 = vpack.c.b16 %v460, %v459
    %v500 = vpack.c.b16 %v462, %v461
    %v501 = vpack.c.b16 %v464, %v463
    %v502 = vpack.c.b16 %v466, %v465
    %v503 = vpack.c.b16 %v468, %v467
    %v504 = vpack.c.b16 %v470, %v469
    %v505 = vpack.c.b16 %v472, %v471
    %v506 = vpack.c.b16 %v474, %v473
    %v507 = vpack.c.b16 %v476, %v475
    %v508 = vpack.c.b16 %v478, %v477
    %v509 = vpack.c.b16 %v480, %v479
    %v510 = vpack.c.b16 %v482, %v481
    %v511 = vpack.c.b16 %v484, %v483
    %v512 = vpack.c.b16 %v486, %v485
    %v513 = vpack.c.b16 %v488, %v487
    %v514 = vpack.c.b16 %v490, %v489
    %539 = vmatpush.bf16.msra.mxu0 %v498
    %540 = vmatpush.bf16.msra.mxu0 %v497
    %541 = vmatpush.bf16.msra.mxu0 %v496
    %542 = vmatpush.bf16.msra.mxu0 %v495
    %543 = vmatpush.bf16.msra.mxu0 %v494
    %544 = vmatpush.bf16.msra.mxu0 %v493
    %545 = vmatpush.bf16.msra.mxu0 %v492
    %546 = vmatpush.bf16.msra.mxu0 %v491
    %547 = vmatmul.bf16.gmra.mxu0 %v389
    %v548 = vpop.f32.mrf.mxu0
    %v549 = vadd.f32 %v382, %v548
    %v550 = vpop.f32.mrf.mxu0
    %551 = vdwg.mxu0
    %552 = vmatpush.bf16.msra.mxu0 %v506
    %553 = vmatpush.bf16.msra.mxu0 %v505
    %554 = vmatpush.bf16.msra.mxu0 %v504
    %555 = vmatpush.bf16.msra.mxu0 %v503
    %556 = vmatpush.bf16.msra.mxu0 %v502
    %557 = vmatpush.bf16.msra.mxu0 %v501
    %558 = vmatpush.bf16.msra.mxu0 %v500
    %559 = vmatpush.bf16.msra.mxu0 %v499
    %560 = vmatmul.bf16.gmra.mxu0 %v390
    %v561 = vpop.f32.mrf.mxu0
    %v562 = vadd.f32 %v549, %v561
    %v563 = vpop.f32.mrf.mxu0
    %564 = vdwg.mxu0
    %565 = vmatpush.bf16.msra.mxu0 %v514
    %566 = vmatpush.bf16.msra.mxu0 %v513
    %567 = vmatpush.bf16.msra.mxu0 %v512
    %568 = vmatpush.bf16.msra.mxu0 %v511
    %569 = vmatpush.bf16.msra.mxu0 %v510
    %570 = vmatpush.bf16.msra.mxu0 %v509
    %571 = vmatpush.bf16.msra.mxu0 %v508
    %572 = vmatpush.bf16.msra.mxu0 %v507
    %573 = vmatmul.bf16.gmra.mxu0 %v391
    %v574 = vpop.f32.mrf.mxu0
    %v575 = vadd.f32 %v562, %v574
    %v576 = vpop.f32.mrf.mxu0
    %577 = vdwg.mxu0
    %578 = vst [vmem:[#allocation8] sm:$0xff] %v575
    // Predicated region
    $region30: #{cheby_kan_forward.1} parent=1 // pred_check
      _
    $region31: #{cheby_kan_forward.1} parent=1 // pred_check_branch
      %580 = sbr.rel (0) target = $region33
    $region32: #{cheby_kan_forward.1} parent=1 // pred_region
      %582 = vsyncadd [#allocation5], 0
      %s584 = sshll.u32 [#allocation8], 4
      %s585 = int_to_ptr.vmem [resolvable:$true] %s584
      %s586 = sshll.u32 %s5, 4
      %s587 = int_to_ptr.hbm [resolvable:$true] %s586
      %589 = dma.vmem_to_hbm [thread:$0]  %s585, 128, %s587, [#allocation5]
    $region33: #{cheby_kan_forward.1} parent=1 // pred_fallthru
      _
    // Predicated region
    $region34: #{cheby_kan_forward.1} parent=1 // pred_check
      _
    $region35: #{cheby_kan_forward.1} parent=1 // pred_check_branch
      %591 = sbr.rel (0) target = $region37
    $region36: #{cheby_kan_forward.1} parent=1 // pred_region
      %593 = dma.done [#allocation5], 128
    $region37: #{cheby_kan_forward.1} parent=1 // pred_fallthru
      _
    %594 = vsyncpa [#allocation4], 1
    %595 = vsyncpa [#allocation7], 1
    %596 = vsyncpa [#allocation5], 1

</llo_original>
